<compile_context>
chip_gen: v7x
topology: tpu7x:2x2x1
jax: 0.10.0
libtpu: 0.0.40
codegen_flags: <defaults>
</compile_context>

<pallas_src>
import functools

import jax
import jax.numpy as jnp
from jax.experimental import pallas as pl
from jax.experimental.pallas import tpu as pltpu

N_MATCH = 14
MATCH_FEAT = 8
BASE_FEAT = 4
SHARED_HID = 16
SHARED_OUT = 4
FINAL_H1 = 128
FINAL_H2 = 64
INPUT_DIM = BASE_FEAT + N_MATCH * MATCH_FEAT      # 116
SHARED_HID_ALL = N_MATCH * SHARED_HID             # 224
SHARED_OUT_ALL = N_MATCH * SHARED_OUT             # 56
CAT_WIDTH = FINAL_H1 + SHARED_HID_ALL             # 352


def sale_predictor_kernel(x_ref,
                          wcat_ref, b1_ref,   # (116,352) [W3_base | blkdiag(W1)], (1,224)
                          w2_ref, b2_ref,     # (224,56) blkdiag(W2), (1,56)
                          w3s_ref, b3_ref,    # (56,128) W3[4:], (1,128)
                          w4_ref, b4_ref,     # (128,64), (1,64)
                          w5_ref, b5_ref,     # (64,out_dim), (1,out_dim)
                          o_ref):
    mm_dt = wcat_ref.dtype                    # matmul operand dtype (f32 or bf16)
    x = x_ref[...]                            # (TB, 116)

    # Single matmul for both x-fed paths; split at the 128-lane boundary.
    y = jnp.dot(x, wcat_ref[...], preferred_element_type=jnp.float32)   # (TB, 352)
    h1_base = y[:, :FINAL_H1]                                           # x_base @ W3[:4]
    h = jnp.maximum(y[:, FINAL_H1:] + b1_ref[...], 0.0)                 # (TB, 224)

    h = jnp.dot(h.astype(mm_dt), w2_ref[...],
                preferred_element_type=jnp.float32) + b2_ref[...]
    h = jnp.maximum(h, 0.0)                                             # (TB, 56)

    h1 = h1_base + jnp.dot(h.astype(mm_dt), w3s_ref[...],
                           preferred_element_type=jnp.float32) + b3_ref[...]
    h1 = jnp.maximum(h1, 0.0)                                           # (TB, 128)

    h2 = jnp.dot(h1.astype(mm_dt), w4_ref[...],
                 preferred_element_type=jnp.float32) + b4_ref[...]
    h2 = jnp.maximum(h2, 0.0)                                           # (TB, 64)

    out = jnp.dot(h2.astype(mm_dt), w5_ref[...],
                  preferred_element_type=jnp.float32) + b5_ref[...]
    o_ref[...] = out.astype(o_ref.dtype)                                # (TB, out_dim)


def _block_diag(w, n):
    k, m = w.shape
    big = jnp.zeros((n * k, n * m), w.dtype)
    for i in range(n):
        big = big.at[i * k:(i + 1) * k, i * m:(i + 1) * m].set(w)
    return big


def prepare_weights(params, *, matmul_dtype=jnp.float32):
    """Restructure the 5 Linear layers ONCE (call when params are loaded,
    outside the per-step jitted forward).  matmul_dtype=jnp.bfloat16 is an
    opt-in for v6e/v7x; biases always stay f32."""
    w1, b1, w2, b2, w3, b3, w4, b4, w5, b5 = params
    out_dim = w5.shape[1]

    w_cat = jnp.zeros((INPUT_DIM, CAT_WIDTH), jnp.float32)
    w_cat = w_cat.at[:BASE_FEAT, :FINAL_H1].set(w3[:BASE_FEAT, :])      # base path of W3
    w_cat = w_cat.at[BASE_FEAT:, FINAL_H1:].set(_block_diag(w1, N_MATCH))

    b1_big = jnp.tile(jnp.reshape(b1, (1, SHARED_HID)), (1, N_MATCH))   # (1, 224)
    w2_big = _block_diag(w2, N_MATCH)                                   # (224, 56)
    b2_big = jnp.tile(jnp.reshape(b2, (1, SHARED_OUT)), (1, N_MATCH))   # (1, 56)
    w3_shared = w3[BASE_FEAT:, :]                                       # (56, 128)

    mm = lambda w: w.astype(matmul_dtype)
    return (mm(w_cat), b1_big.astype(jnp.float32),
            mm(w2_big), b2_big.astype(jnp.float32),
            mm(w3_shared), jnp.reshape(b3, (1, FINAL_H1)).astype(jnp.float32),
            mm(w4), jnp.reshape(b4, (1, FINAL_H2)).astype(jnp.float32),
            mm(w5), jnp.reshape(b5, (1, out_dim)).astype(jnp.float32))


def _round_up(v, m):
    return ((v + m - 1) // m) * m


def _choose_tile(batch, block_rows):
    block_rows = max(8, (block_rows // 8) * 8)
    if batch > block_rows:
        return block_rows
    if batch % 8 != 0:
        # A block whose sublane dim equals the full batch dim is always legal.
        return batch
    if batch >= 16:
        # Aim for >=2 grid steps so both v7x TensorCores get balanced work.
        return min(block_rows, _round_up(pl.cdiv(batch, 2), 8))
    return batch


def sale_predictor(x, weights, *, block_rows=2048):
    """x: (B, 116). weights: tuple from prepare_weights()."""
    w_cat, b1, w2, b2, w3s, b3, w4, b4, w5, b5 = weights
    out_dim = w5.shape[1]
    B = x.shape[0]
    assert x.shape[1] == INPUT_DIM

    if x.dtype != w_cat.dtype:                 # bf16 matmul-operand mode
        x = x.astype(w_cat.dtype)

    tb = _choose_tile(B, block_rows)
    grid = (pl.cdiv(B, tb),)

    # ---- rooflines / VMEM sizing -------------------------------------------
    weight_bytes = sum(int(w.size) * w.dtype.itemsize for w in weights)
    flops_per_row = 2 * (INPUT_DIM * CAT_WIDTH
                         + SHARED_HID_ALL * SHARED_OUT_ALL
                         + SHARED_OUT_ALL * FINAL_H1
                         + FINAL_H1 * FINAL_H2
                         + FINAL_H2 * out_dim)
    cost = pl.CostEstimate(
        flops=B * flops_per_row,
        transcendentals=0,
        bytes_accessed=B * (INPUT_DIM * x.dtype.itemsize + out_dim * 4) + weight_bytes)

    # Double-buffered x/out tiles + resident weights + f32 intermediates (x2 margin).
    interm = tb * (CAT_WIDTH + SHARED_OUT_ALL + FINAL_H1 + FINAL_H2 + out_dim) * 4
    vmem_est = (2 * tb * INPUT_DIM * x.dtype.itemsize
                + 2 * tb * out_dim * 4
                + 2 * weight_bytes
                + 2 * interm)
    vmem_limit = int(min(max(vmem_est + (4 << 20), 16 << 20), 56 << 20))  # v7x-safe cap

    return pl.pallas_call(
        sale_predictor_kernel,
        out_shape=jax.ShapeDtypeStruct((B, out_dim), jnp.float32),
        grid=grid,
        in_specs=[pl.BlockSpec((tb, INPUT_DIM), lambda i: (i, 0))] +
                 [pl.BlockSpec(w.shape, lambda i: (0, 0)) for w in weights],
        out_specs=pl.BlockSpec((tb, out_dim), lambda i: (i, 0)),
        compiler_params=pltpu.CompilerParams(
            dimension_semantics=("parallel",),
            vmem_limit_bytes=vmem_limit),
        cost_estimate=cost,
    )(x, *weights)


def init_params(key, output_dim):
    """Deterministic init mimicking nn.Linear default (uniform +-1/sqrt(fan_in)).
    Weights stored as (in_features, out_features); biases as (1, out_features)."""
    shapes = [
        (MATCH_FEAT, SHARED_HID),                        # shared Linear(8, 16)
        (SHARED_HID, SHARED_OUT),                        # shared Linear(16, 4)
        (BASE_FEAT + SHARED_OUT * N_MATCH, FINAL_H1),    # final Linear(60, 128)
        (FINAL_H1, FINAL_H2),                            # final Linear(128, 64)
        (FINAL_H2, output_dim),                          # final Linear(64, out)
    ]
    params = []
    for shp in shapes:
        key, kw, kb = jax.random.split(key, 3)
        bound = 1.0 / (shp[0] ** 0.5)
        w = jax.random.uniform(kw, shp, jnp.float32, -bound, bound)
        b = jax.random.uniform(kb, (1, shp[1]), jnp.float32, -bound, bound)
        params += [w, b]
    return tuple(params)


def reference_forward(x, params):
    """Pure-JAX reference matching the PyTorch module semantics."""
    w1, b1, w2, b2, w3, b3, w4, b4, w5, b5 = params
    base = x[:, :BASE_FEAT]
    matches = x[:, BASE_FEAT:].reshape(-1, N_MATCH, MATCH_FEAT)
    shared = []
    for i in range(N_MATCH):
        s = jnp.maximum(matches[:, i, :] @ w1 + b1, 0.0)
        s = jnp.maximum(s @ w2 + b2, 0.0)
        shared.append(s)
    combined = jnp.concatenate([base] + shared, axis=1)
    h = jnp.maximum(combined @ w3 + b3, 0.0)
    h = jnp.maximum(h @ w4 + b4, 0.0)
    return h @ w5 + b5


if __name__ == "__main__":
    B = 8
    OUTPUT_DIM = 4

    key = jax.random.PRNGKey(0)
    kx, kp = jax.random.split(key)
    x = jax.random.normal(kx, (B, INPUT_DIM), jnp.float32)
    params = init_params(kp, OUTPUT_DIM)

    # Weight restructuring is hoisted out of the hot path: built once, reused.
    weights = jax.block_until_ready(prepare_weights(params))

    fwd = jax.jit(functools.partial(sale_predictor, block_rows=2048))
    out = jax.block_until_ready(fwd(x, weights))

    ref = reference_forward(x, params)
    assert out.shape == (B, OUTPUT_DIM)
    assert jnp.allclose(out, ref, atol=1e-4, rtol=1e-4), \
        float(jnp.max(jnp.abs(out - ref)))

    print("KERNEL_OK")
</pallas_src>

<mosaic_0001>
module attributes {stable_mosaic.version = 11 : i64} {
  func.func @sale_predictor_kernel(%arg0: i32, %arg1: memref<8x116xf32, #tpu.memory_space<vmem>>, %arg2: memref<116x352xf32, #tpu.memory_space<vmem>>, %arg3: memref<1x224xf32, #tpu.memory_space<vmem>>, %arg4: memref<224x56xf32, #tpu.memory_space<vmem>>, %arg5: memref<1x56xf32, #tpu.memory_space<vmem>>, %arg6: memref<56x128xf32, #tpu.memory_space<vmem>>, %arg7: memref<1x128xf32, #tpu.memory_space<vmem>>, %arg8: memref<128x64xf32, #tpu.memory_space<vmem>>, %arg9: memref<1x64xf32, #tpu.memory_space<vmem>>, %arg10: memref<64x4xf32, #tpu.memory_space<vmem>>, %arg11: memref<1x4xf32, #tpu.memory_space<vmem>>, %arg12: memref<8x4xf32, #tpu.memory_space<vmem>>) attributes {dimension_semantics = [#tpu.dimension_semantics<parallel>], iteration_bounds = array<i64: 1>, scalar_prefetch = 0 : i64, scratch_operands = 0 : i64, tpu.core_type = #tpu.core_type<tc>, window_params = [{transform_indices = @transform_0, window_bounds = array<i64: 8, 116>}, {pipeline_mode = #tpu.pipeline_mode<synchronous>, transform_indices = @transform_1, window_bounds = array<i64: 116, 352>}, {pipeline_mode = #tpu.pipeline_mode<synchronous>, transform_indices = @transform_2, window_bounds = array<i64: 1, 224>}, {pipeline_mode = #tpu.pipeline_mode<synchronous>, transform_indices = @transform_3, window_bounds = array<i64: 224, 56>}, {pipeline_mode = #tpu.pipeline_mode<synchronous>, transform_indices = @transform_4, window_bounds = array<i64: 1, 56>}, {pipeline_mode = #tpu.pipeline_mode<synchronous>, transform_indices = @transform_5, window_bounds = array<i64: 56, 128>}, {pipeline_mode = #tpu.pipeline_mode<synchronous>, transform_indices = @transform_6, window_bounds = array<i64: 1, 128>}, {pipeline_mode = #tpu.pipeline_mode<synchronous>, transform_indices = @transform_7, window_bounds = array<i64: 128, 64>}, {pipeline_mode = #tpu.pipeline_mode<synchronous>, transform_indices = @transform_8, window_bounds = array<i64: 1, 64>}, {pipeline_mode = #tpu.pipeline_mode<synchronous>, transform_indices = @transform_9, window_bounds = array<i64: 64, 4>}, {pipeline_mode = #tpu.pipeline_mode<synchronous>, transform_indices = @transform_10, window_bounds = array<i64: 1, 4>}, {transform_indices = @transform_11, window_bounds = array<i64: 8, 4>}]} {
    %c0 = arith.constant 0 : index
    %c0_0 = arith.constant 0 : index
    %0 = vector.load %arg1[%c0, %c0_0] : memref<8x116xf32, #tpu.memory_space<vmem>>, vector<8x116xf32>
    %c0_1 = arith.constant 0 : index
    %c0_2 = arith.constant 0 : index
    %1 = vector.load %arg2[%c0_1, %c0_2] : memref<116x352xf32, #tpu.memory_space<vmem>>, vector<116x352xf32>
    %cst = arith.constant dense<0.000000e+00> : vector<8x352xf32>
    %2 = tpu.matmul %0, %1, %cst {dimension_numbers = #tpu.dot_dimension_numbers<[1], [0], [0], [1], [0, 0, 1, 1], [], []>} : vector<8x116xf32>, vector<116x352xf32>, vector<8x352xf32> -> vector<8x352xf32>
    %3 = vector.extract_strided_slice %2 {offsets = [0, 0], sizes = [8, 128], strides = [1, 1]} : vector<8x352xf32> to vector<8x128xf32>
    %4 = vector.extract_strided_slice %2 {offsets = [0, 128], sizes = [8, 224], strides = [1, 1]} : vector<8x352xf32> to vector<8x224xf32>
    %c0_3 = arith.constant 0 : index
    %c0_4 = arith.constant 0 : index
    %5 = vector.load %arg3[%c0_3, %c0_4] : memref<1x224xf32, #tpu.memory_space<vmem>>, vector<1x224xf32>
    %6 = vector.broadcast %5 : vector<1x224xf32> to vector<8x224xf32>
    %7 = arith.addf %4, %6 : vector<8x224xf32>
    %cst_5 = arith.constant 0.000000e+00 : f32
    %8 = vector.broadcast %cst_5 : f32 to vector<8x224xf32>
    %9 = arith.maximumf %7, %8 : vector<8x224xf32>
    %c0_6 = arith.constant 0 : index
    %c0_7 = arith.constant 0 : index
    %10 = vector.load %arg4[%c0_6, %c0_7] : memref<224x56xf32, #tpu.memory_space<vmem>>, vector<224x56xf32>
    %cst_8 = arith.constant dense<0.000000e+00> : vector<8x56xf32>
    %11 = tpu.matmul %9, %10, %cst_8 {dimension_numbers = #tpu.dot_dimension_numbers<[1], [0], [0], [1], [0, 0, 1, 1], [], []>} : vector<8x224xf32>, vector<224x56xf32>, vector<8x56xf32> -> vector<8x56xf32>
    %c0_9 = arith.constant 0 : index
    %c0_10 = arith.constant 0 : index
    %12 = vector.load %arg5[%c0_9, %c0_10] : memref<1x56xf32, #tpu.memory_space<vmem>>, vector<1x56xf32>
    %13 = vector.broadcast %12 : vector<1x56xf32> to vector<8x56xf32>
    %14 = arith.addf %11, %13 : vector<8x56xf32>
    %cst_11 = arith.constant 0.000000e+00 : f32
    %15 = vector.broadcast %cst_11 : f32 to vector<8x56xf32>
    %16 = arith.maximumf %14, %15 : vector<8x56xf32>
    %c0_12 = arith.constant 0 : index
    %c0_13 = arith.constant 0 : index
    %17 = vector.load %arg6[%c0_12, %c0_13] : memref<56x128xf32, #tpu.memory_space<vmem>>, vector<56x128xf32>
    %cst_14 = arith.constant dense<0.000000e+00> : vector<8x128xf32>
    %18 = tpu.matmul %16, %17, %cst_14 {dimension_numbers = #tpu.dot_dimension_numbers<[1], [0], [0], [1], [0, 0, 1, 1], [], []>} : vector<8x56xf32>, vector<56x128xf32>, vector<8x128xf32> -> vector<8x128xf32>
    %19 = arith.addf %3, %18 : vector<8x128xf32>
    %c0_15 = arith.constant 0 : index
    %c0_16 = arith.constant 0 : index
    %20 = vector.load %arg7[%c0_15, %c0_16] : memref<1x128xf32, #tpu.memory_space<vmem>>, vector<1x128xf32>
    %21 = vector.broadcast %20 : vector<1x128xf32> to vector<8x128xf32>
    %22 = arith.addf %19, %21 : vector<8x128xf32>
    %cst_17 = arith.constant 0.000000e+00 : f32
    %23 = vector.broadcast %cst_17 : f32 to vector<8x128xf32>
    %24 = arith.maximumf %22, %23 : vector<8x128xf32>
    %c0_18 = arith.constant 0 : index
    %c0_19 = arith.constant 0 : index
    %25 = vector.load %arg8[%c0_18, %c0_19] : memref<128x64xf32, #tpu.memory_space<vmem>>, vector<128x64xf32>
    %cst_20 = arith.constant dense<0.000000e+00> : vector<8x64xf32>
    %26 = tpu.matmul %24, %25, %cst_20 {dimension_numbers = #tpu.dot_dimension_numbers<[1], [0], [0], [1], [0, 0, 1, 1], [], []>} : vector<8x128xf32>, vector<128x64xf32>, vector<8x64xf32> -> vector<8x64xf32>
    %c0_21 = arith.constant 0 : index
    %c0_22 = arith.constant 0 : index
    %27 = vector.load %arg9[%c0_21, %c0_22] : memref<1x64xf32, #tpu.memory_space<vmem>>, vector<1x64xf32>
    %28 = vector.broadcast %27 : vector<1x64xf32> to vector<8x64xf32>
    %29 = arith.addf %26, %28 : vector<8x64xf32>
    %cst_23 = arith.constant 0.000000e+00 : f32
    %30 = vector.broadcast %cst_23 : f32 to vector<8x64xf32>
    %31 = arith.maximumf %29, %30 : vector<8x64xf32>
    %c0_24 = arith.constant 0 : index
    %c0_25 = arith.constant 0 : index
    %32 = vector.load %arg10[%c0_24, %c0_25] : memref<64x4xf32, #tpu.memory_space<vmem>>, vector<64x4xf32>
    %cst_26 = arith.constant dense<0.000000e+00> : vector<8x4xf32>
    %33 = tpu.matmul %31, %32, %cst_26 {dimension_numbers = #tpu.dot_dimension_numbers<[1], [0], [0], [1], [0, 0, 1, 1], [], []>} : vector<8x64xf32>, vector<64x4xf32>, vector<8x4xf32> -> vector<8x4xf32>
    %c0_27 = arith.constant 0 : index
    %c0_28 = arith.constant 0 : index
    %34 = vector.load %arg11[%c0_27, %c0_28] : memref<1x4xf32, #tpu.memory_space<vmem>>, vector<1x4xf32>
    %35 = vector.broadcast %34 : vector<1x4xf32> to vector<8x4xf32>
    %36 = arith.addf %33, %35 : vector<8x4xf32>
    %c0_29 = arith.constant 0 : index
    %c0_30 = arith.constant 0 : index
    %37 = vector.load %arg12[%c0_29, %c0_30] : memref<8x4xf32, #tpu.memory_space<vmem>>, vector<8x4xf32>
    tpu.vector_store %arg12[%c0_29, %c0_30], %36 {strides = array<i32>} : memref<8x4xf32, #tpu.memory_space<vmem>>, vector<8x4xf32>,
    return
  }
  func.func @transform_0(%arg0: i32) -> (i32, i32) {
    %c0_i32 = arith.constant 0 : i32
    %c0_i32_0 = arith.constant 0 : i32
    return %arg0, %c0_i32 : i32, i32
  }
  func.func @transform_1(%arg0: i32) -> (i32, i32) {
    %c0_i32 = arith.constant 0 : i32
    %c0_i32_0 = arith.constant 0 : i32
    %c0_i32_1 = arith.constant 0 : i32
    return %c0_i32, %c0_i32_0 : i32, i32
  }
  func.func @transform_2(%arg0: i32) -> (i32, i32) {
    %c0_i32 = arith.constant 0 : i32
    %c0_i32_0 = arith.constant 0 : i32
    %c0_i32_1 = arith.constant 0 : i32
    return %c0_i32, %c0_i32_0 : i32, i32
  }
  func.func @transform_3(%arg0: i32) -> (i32, i32) {
    %c0_i32 = arith.constant 0 : i32
    %c0_i32_0 = arith.constant 0 : i32
    %c0_i32_1 = arith.constant 0 : i32
    return %c0_i32, %c0_i32_0 : i32, i32
  }
  func.func @transform_4(%arg0: i32) -> (i32, i32) {
    %c0_i32 = arith.constant 0 : i32
    %c0_i32_0 = arith.constant 0 : i32
    %c0_i32_1 = arith.constant 0 : i32
    return %c0_i32, %c0_i32_0 : i32, i32
  }
  func.func @transform_5(%arg0: i32) -> (i32, i32) {
    %c0_i32 = arith.constant 0 : i32
    %c0_i32_0 = arith.constant 0 : i32
    %c0_i32_1 = arith.constant 0 : i32
    return %c0_i32, %c0_i32_0 : i32, i32
  }
  func.func @transform_6(%arg0: i32) -> (i32, i32) {
    %c0_i32 = arith.constant 0 : i32
    %c0_i32_0 = arith.constant 0 : i32
    %c0_i32_1 = arith.constant 0 : i32
    return %c0_i32, %c0_i32_0 : i32, i32
  }
  func.func @transform_7(%arg0: i32) -> (i32, i32) {
    %c0_i32 = arith.constant 0 : i32
    %c0_i32_0 = arith.constant 0 : i32
    %c0_i32_1 = arith.constant 0 : i32
    return %c0_i32, %c0_i32_0 : i32, i32
  }
  func.func @transform_8(%arg0: i32) -> (i32, i32) {
    %c0_i32 = arith.constant 0 : i32
    %c0_i32_0 = arith.constant 0 : i32
    %c0_i32_1 = arith.constant 0 : i32
    return %c0_i32, %c0_i32_0 : i32, i32
  }
  func.func @transform_9(%arg0: i32) -> (i32, i32) {
    %c0_i32 = arith.constant 0 : i32
    %c0_i32_0 = arith.constant 0 : i32
    %c0_i32_1 = arith.constant 0 : i32
    return %c0_i32, %c0_i32_0 : i32, i32
  }
  func.func @transform_10(%arg0: i32) -> (i32, i32) {
    %c0_i32 = arith.constant 0 : i32
    %c0_i32_0 = arith.constant 0 : i32
    %c0_i32_1 = arith.constant 0 : i32
    return %c0_i32, %c0_i32_0 : i32, i32
  }
  func.func @transform_11(%arg0: i32) -> (i32, i32) {
    %c0_i32 = arith.constant 0 : i32
    %c0_i32_0 = arith.constant 0 : i32
    return %arg0, %c0_i32 : i32, i32
  }
}

</mosaic_0001>

<llo_original>
// kernel: sale_predictor.1
$region0: #{sale_predictor.1}
  #allocation0 [shape = 'u32[]', space=smem, size = 0x4, offset = 0x4, fixed_abs, tag = 'smem constant byte address 0x4 - core index']
  #allocation1 [shape = 'u32[144,128]{1,0:T(1,128)}', space=vmem, size = 0x12000, scoped, tag = 'internal scratch']
  %s0 = inlined_call_operand.vmem [shape: f32[8,116], index: 0, kind: input, shape index: {}]
  %s1 = inlined_call_operand.vmem [shape: f32[116,352], index: 1, kind: input, shape index: {}]
  %s2 = inlined_call_operand.vmem [shape: f32[1,224], index: 2, kind: input, shape index: {}]
  %s3 = inlined_call_operand.vmem [shape: f32[224,56], index: 3, kind: input, shape index: {}]
  %s4 = inlined_call_operand.vmem [shape: f32[1,56], index: 4, kind: input, shape index: {}]
  %s5 = inlined_call_operand.vmem [shape: f32[56,128], index: 5, kind: input, shape index: {}]
  %s6 = inlined_call_operand.vmem [shape: f32[1,128], index: 6, kind: input, shape index: {}]
  %s7 = inlined_call_operand.vmem [shape: f32[128,64], index: 7, kind: input, shape index: {}]
  %s8 = inlined_call_operand.vmem [shape: f32[1,64], index: 8, kind: input, shape index: {}]
  %s9 = inlined_call_operand.vmem [shape: f32[64,4], index: 9, kind: input, shape index: {}]
  %s10 = inlined_call_operand.vmem [shape: f32[1,4], index: 10, kind: input, shape index: {}]
  %s11 = inlined_call_operand.vmem [shape: f32[8,4], index: 11, kind: output, shape index: {}]
  %s12 = sld [smem:[#allocation0]]
  $region54: #{sale_predictor.1} parent=0
    _
  %s14 = ssub.s32 1, %s12
  %s15 = scalar_select 0, %s14, %s12
  // Predicated region
  $region2: #{sale_predictor.1} parent=0 // pred_check
    _
  $region3: #{sale_predictor.1} parent=0 // pred_check_branch
    %17 = sbr.rel (0) target = $region5
  $region4: #{sale_predictor.1} parent=0 // pred_region
    _
  $region5: #{sale_predictor.1} parent=0 // pred_fallthru
    _
  // Predicated region
  $region6: #{sale_predictor.1} parent=0 // pred_check
    _
  $region7: #{sale_predictor.1} parent=0 // pred_check_branch
    %19 = sbr.rel (0) target = $region9
  $region8: #{sale_predictor.1} parent=0 // pred_region
    _
  $region9: #{sale_predictor.1} parent=0 // pred_fallthru
    _
  // Predicated region
  $region10: #{sale_predictor.1} parent=0 // pred_check
    _
  $region11: #{sale_predictor.1} parent=0 // pred_check_branch
    %21 = sbr.rel (0) target = $region13
  $region12: #{sale_predictor.1} parent=0 // pred_region
    _
  $region13: #{sale_predictor.1} parent=0 // pred_fallthru
    _
  // Predicated region
  $region14: #{sale_predictor.1} parent=0 // pred_check
    _
  $region15: #{sale_predictor.1} parent=0 // pred_check_branch
    %23 = sbr.rel (0) target = $region17
  $region16: #{sale_predictor.1} parent=0 // pred_region
    _
  $region17: #{sale_predictor.1} parent=0 // pred_fallthru
    _
  // Predicated region
  $region18: #{sale_predictor.1} parent=0 // pred_check
    _
  $region19: #{sale_predictor.1} parent=0 // pred_check_branch
    %25 = sbr.rel (0) target = $region21
  $region20: #{sale_predictor.1} parent=0 // pred_region
    _
  $region21: #{sale_predictor.1} parent=0 // pred_fallthru
    _
  // Predicated region
  $region22: #{sale_predictor.1} parent=0 // pred_check
    _
  $region23: #{sale_predictor.1} parent=0 // pred_check_branch
    %27 = sbr.rel (0) target = $region25
  $region24: #{sale_predictor.1} parent=0 // pred_region
    _
  $region25: #{sale_predictor.1} parent=0 // pred_fallthru
    _
  // Predicated region
  $region26: #{sale_predictor.1} parent=0 // pred_check
    _
  $region27: #{sale_predictor.1} parent=0 // pred_check_branch
    %29 = sbr.rel (0) target = $region29
  $region28: #{sale_predictor.1} parent=0 // pred_region
    _
  $region29: #{sale_predictor.1} parent=0 // pred_fallthru
    _
  // Predicated region
  $region30: #{sale_predictor.1} parent=0 // pred_check
    _
  $region31: #{sale_predictor.1} parent=0 // pred_check_branch
    %31 = sbr.rel (0) target = $region33
  $region32: #{sale_predictor.1} parent=0 // pred_region
    _
  $region33: #{sale_predictor.1} parent=0 // pred_fallthru
    _
  // Predicated region
  $region34: #{sale_predictor.1} parent=0 // pred_check
    _
  $region35: #{sale_predictor.1} parent=0 // pred_check_branch
    %33 = sbr.rel (0) target = $region37
  $region36: #{sale_predictor.1} parent=0 // pred_region
    _
  $region37: #{sale_predictor.1} parent=0 // pred_fallthru
    _
  // Predicated region
  $region38: #{sale_predictor.1} parent=0 // pred_check
    _
  $region39: #{sale_predictor.1} parent=0 // pred_check_branch
    %35 = sbr.rel (0) target = $region41
  $region40: #{sale_predictor.1} parent=0 // pred_region
    _
  $region41: #{sale_predictor.1} parent=0 // pred_fallthru
    _
  // Predicated region
  $region42: #{sale_predictor.1} parent=0 // pred_check
    _
  $region43: #{sale_predictor.1} parent=0 // pred_check_branch
    %37 = sbr.rel (0) target = $region45
  $region44: #{sale_predictor.1} parent=0 // pred_region
    _
  $region45: #{sale_predictor.1} parent=0 // pred_fallthru
    _
  %v38 = vld [vmem:[%s0] sm:$0xff]
  %v39 = vld [vmem:[%s1] sm:$0xff]
  %v40 = vld [vmem:[%s1 + $0x8] sm:$0xff]
  %v41 = vld [vmem:[%s1 + $0x10] sm:$0xff]
  %v42 = vld [vmem:[%s1 + $0x18] sm:$0xff]
  %v43 = vld [vmem:[%s1 + $0x20] sm:$0xff]
  %v44 = vld [vmem:[%s1 + $0x28] sm:$0xff]
  %v45 = vld [vmem:[%s1 + $0x30] sm:$0xff]
  %v46 = vld [vmem:[%s1 + $0x38] sm:$0xff]
  %v47 = vld [vmem:[%s1 + $0x40] sm:$0xff]
  %v48 = vld [vmem:[%s1 + $0x48] sm:$0xff]
  %v49 = vld [vmem:[%s1 + $0x50] sm:$0xff]
  %v50 = vld [vmem:[%s1 + $0x58] sm:$0xff]
  %v51 = vld [vmem:[%s1 + $0x60] sm:$0xff]
  %v52 = vld [vmem:[%s1 + $0x68] sm:$0xff]
  %v53 = vld [vmem:[%s1 + $0x70] sm:$0xff]
  %v54 = vld [vmem:[%s1 + $0x78] sm:$0xff]
  %v55 = vld [vmem:[%s1 + $0x80] sm:$0xff]
  %v56 = vld [vmem:[%s1 + $0x88] sm:$0xff]
  %v57 = vld [vmem:[%s1 + $0x90] sm:$0xff]
  %v58 = vld [vmem:[%s1 + $0x98] sm:$0xff]
  %v59 = vld [vmem:[%s1 + $0xa0] sm:$0xff]
  %v60 = vld [vmem:[%s1 + $0xa8] sm:$0xff]
  %v61 = vld [vmem:[%s1 + $0xb0] sm:$0xff]
  %v62 = vld [vmem:[%s1 + $0xb8] sm:$0xff]
  %v63 = vld [vmem:[%s1 + $0xc0] sm:$0xff]
  %v64 = vld [vmem:[%s1 + $0xc8] sm:$0xff]
  %v65 = vld [vmem:[%s1 + $0xd0] sm:$0xff]
  %v66 = vld [vmem:[%s1 + $0xd8] sm:$0xff]
  %v67 = vld [vmem:[%s1 + $0xe0] sm:$0xff]
  %v68 = vld [vmem:[%s1 + $0xe8] sm:$0xff]
  %v69 = vld [vmem:[%s1 + $0xf0] sm:$0xff]
  %v70 = vld [vmem:[%s1 + $0xf8] sm:$0xff]
  %v71 = vld [vmem:[%s1 + $0x100] sm:$0xff]
  %v72 = vld [vmem:[%s1 + $0x108] sm:$0xff]
  %v73 = vld [vmem:[%s1 + $0x110] sm:$0xff]
  %v74 = vld [vmem:[%s1 + $0x118] sm:$0xff]
  %v75 = vld [vmem:[%s1 + $0x120] sm:$0xff]
  %v76 = vld [vmem:[%s1 + $0x128] sm:$0xff]
  %v77 = vld [vmem:[%s1 + $0x130] sm:$0xff]
  %v78 = vld [vmem:[%s1 + $0x138] sm:$0xff]
  %v79 = vld [vmem:[%s1 + $0x140] sm:$0xff]
  %v80 = vld [vmem:[%s1 + $0x148] sm:$0xff]
  %v81 = vld [vmem:[%s1 + $0x150] sm:$0xf]
  %v82 = vld [vmem:[%s1 + $0x158] sm:$0xf]
  %v83 = vld [vmem:[%s1 + $0x160] sm:$0xf]
  %vm84 = vcmask 949248
  %v86 = vsel %vm84, %v38, 0
  %vm88 = vcmask 1043456
  %v90 = vsel %vm88, %v81, 0
  %v93 = vsel %vm88, %v82, 0
  %v96 = vsel %vm88, %v83, 0
  %98 = vmatprep.subr.mxu0 %v40
  %99 = vmatpush1.msra.mxu0 %v39
  %100 = vmatprep.subr.mxu0 %v43
  %101 = vmatpush1.msra.mxu0 %v42
  %102 = vmatprep.subr.mxu0 %v46
  %103 = vmatpush1.msra.mxu0 %v45
  %104 = vmatprep.subr.mxu0 %v49
  %105 = vmatpush1.msra.mxu0 %v48
  %106 = vmatprep.subr.mxu0 %v52
  %107 = vmatpush1.msra.mxu0 %v51
  %108 = vmatprep.subr.mxu0 %v55
  %109 = vmatpush1.msra.mxu0 %v54
  %110 = vmatprep.subr.mxu0 %v58
  %111 = vmatpush1.msra.mxu0 %v57
  %112 = vmatprep.subr.mxu0 %v61
  %113 = vmatpush1.msra.mxu0 %v60
  %114 = vmatprep.subr.mxu0 %v64
  %115 = vmatpush1.msra.mxu0 %v63
  %116 = vmatprep.subr.mxu0 %v67
  %117 = vmatpush1.msra.mxu0 %v66
  %118 = vmatprep.subr.mxu0 %v70
  %119 = vmatpush1.msra.mxu0 %v69
  %120 = vmatprep.subr.mxu0 %v73
  %121 = vmatpush1.msra.mxu0 %v72
  %122 = vmatprep.subr.mxu0 %v76
  %123 = vmatpush1.msra.mxu0 %v75
  %124 = vmatprep.subr.mxu0 %v79
  %125 = vmatpush1.msra.mxu0 %v78
  %126 = vmatprep.subr.mxu0 %v93
  %127 = vmatpush1.msra.mxu0 %v90
  %128 = vmatprep.subr.mxu0 0.0
  %129 = vmatpush1.msra.mxu0 0.0
  %130 = vmatprep.subr.mxu0 0.0
  %131 = vmatpush1.msra.mxu0 0.0
  %132 = vmatprep.subr.mxu0 0.0
  %133 = vmatpush1.msra.mxu0 0.0
  %134 = vmatprep.subr.mxu0 0.0
  %135 = vmatpush1.msra.mxu0 0.0
  %136 = vmatprep.subr.mxu0 0.0
  %137 = vmatpush1.msra.mxu0 0.0
  %138 = vmatprep.subr.mxu0 0.0
  %139 = vmatpush1.msra.mxu0 0.0
  %140 = vmatprep.subr.mxu0 0.0
  %141 = vmatpush1.msra.mxu0 0.0
  %142 = vmatprep.subr.mxu0 0.0
  %143 = vmatpush1.msra.mxu0 0.0
  %144 = vmatprep.subr.mxu0 0.0
  %145 = vmatpush1.msra.mxu0 0.0
  %146 = vmatprep.subr.mxu0 0.0
  %147 = vmatpush1.msra.mxu0 0.0
  %148 = vmatprep.subr.mxu0 0.0
  %149 = vmatpush1.msra.mxu0 0.0
  %150 = vmatprep.subr.mxu0 0.0
  %151 = vmatpush1.msra.mxu0 0.0
  %152 = vmatprep.subr.mxu0 0.0
  %153 = vmatpush1.msra.mxu0 0.0
  %154 = vmatprep.subr.mxu0 0.0
  %155 = vmatpush1.msra.mxu0 0.0
  %156 = vmatprep.subr.mxu0 0.0
  %157 = vmatpush1.msra.mxu0 0.0
  %158 = vmatprep.subr.mxu0 0.0
  %159 = vmatpush1.msra.mxu0 0.0
  %160 = vmatprep.subr.mxu0 0.0
  %161 = vmatpush1.msra.mxu0 0.0
  %162 = vmatprep.mubr.f32.mxu0 0.0
  %163 = vmatmul.mubr.f32.gmra.mrb[0].mxu0 %v86
  %v164 = vpop.f32.mrb[0].mxu0
  %v165 = vadd.f32 0.0, %v164
  %v166 = vpop.f32.mrb[0].mxu0
  %v167 = vadd.f32 0.0, %v166
  %168 = vdwg.mxu0
  %169 = vmatprep.subr.mxu0 0.0
  %170 = vmatpush1.msra.mxu0 %v41
  %171 = vmatprep.subr.mxu0 0.0
  %172 = vmatpush1.msra.mxu0 %v44
  %173 = vmatprep.subr.mxu0 0.0
  %174 = vmatpush1.msra.mxu0 %v47
  %175 = vmatprep.subr.mxu0 0.0
  %176 = vmatpush1.msra.mxu0 %v50
  %177 = vmatprep.subr.mxu0 0.0
  %178 = vmatpush1.msra.mxu0 %v53
  %179 = vmatprep.subr.mxu0 0.0
  %180 = vmatpush1.msra.mxu0 %v56
  %181 = vmatprep.subr.mxu0 0.0
  %182 = vmatpush1.msra.mxu0 %v59
  %183 = vmatprep.subr.mxu0 0.0
  %184 = vmatpush1.msra.mxu0 %v62
  %185 = vmatprep.subr.mxu0 0.0
  %186 = vmatpush1.msra.mxu0 %v65
  %187 = vmatprep.subr.mxu0 0.0
  %188 = vmatpush1.msra.mxu0 %v68
  %189 = vmatprep.subr.mxu0 0.0
  %190 = vmatpush1.msra.mxu0 %v71
  %191 = vmatprep.subr.mxu0 0.0
  %192 = vmatpush1.msra.mxu0 %v74
  %193 = vmatprep.subr.mxu0 0.0
  %194 = vmatpush1.msra.mxu0 %v77
  %195 = vmatprep.subr.mxu0 0.0
  %196 = vmatpush1.msra.mxu0 %v80
  %197 = vmatprep.subr.mxu0 0.0
  %198 = vmatpush1.msra.mxu0 %v96
  %199 = vmatprep.subr.mxu0 0.0
  %200 = vmatpush1.msra.mxu0 0.0
  %201 = vmatprep.subr.mxu0 0.0
  %202 = vmatpush1.msra.mxu0 0.0
  %203 = vmatprep.subr.mxu0 0.0
  %204 = vmatpush1.msra.mxu0 0.0
  %205 = vmatprep.subr.mxu0 0.0
  %206 = vmatpush1.msra.mxu0 0.0
  %207 = vmatprep.subr.mxu0 0.0
  %208 = vmatpush1.msra.mxu0 0.0
  %209 = vmatprep.subr.mxu0 0.0
  %210 = vmatpush1.msra.mxu0 0.0
  %211 = vmatprep.subr.mxu0 0.0
  %212 = vmatpush1.msra.mxu0 0.0
  %213 = vmatprep.subr.mxu0 0.0
  %214 = vmatpush1.msra.mxu0 0.0
  %215 = vmatprep.subr.mxu0 0.0
  %216 = vmatpush1.msra.mxu0 0.0
  %217 = vmatprep.subr.mxu0 0.0
  %218 = vmatpush1.msra.mxu0 0.0
  %219 = vmatprep.subr.mxu0 0.0
  %220 = vmatpush1.msra.mxu0 0.0
  %221 = vmatprep.subr.mxu0 0.0
  %222 = vmatpush1.msra.mxu0 0.0
  %223 = vmatprep.subr.mxu0 0.0
  %224 = vmatpush1.msra.mxu0 0.0
  %225 = vmatprep.subr.mxu0 0.0
  %226 = vmatpush1.msra.mxu0 0.0
  %227 = vmatprep.subr.mxu0 0.0
  %228 = vmatpush1.msra.mxu0 0.0
  %229 = vmatprep.subr.mxu0 0.0
  %230 = vmatpush1.msra.mxu0 0.0
  %231 = vmatprep.subr.mxu0 0.0
  %232 = vmatpush1.msra.mxu0 0.0
  %233 = vmatprep.mubr.f32.mxu0 0.0
  %234 = vmatmul.mubr.f32.gmra.mrb[0].mxu0 %v86
  %v235 = vpop.f32.mrb[0].mxu0
  %v236 = vadd.f32 0.0, %v235
  %v237 = vpop.f32.mrb[0].mxu0
  %238 = vdwg.mxu0
  %v239 = vld [vmem:[%s2] sm:$0x3]
  %v241 = vlaneseq
  %v242 = vshrl.u32 %v241, 7
  %v243 = vsub.s32 0, %v242
  %v244 = vrot.slane %v239, %v243
  %v245 = vlaneseq
  %v246 = vshrl.u32 %v245, 7
  %v247 = vsub.s32 1, %v246
  %v248 = vrot.slane %v239, %v247
  %v251 = vadd.f32 %v167, %v244
  %v252 = vadd.f32 %v236, %v248
  %v253 = vmax.f32 %v251, 0.0
  %v254 = vmax.f32 %v252, 0.0
  %v255 = vld [vmem:[%s3] sm:$0xff]
  %v256 = vld [vmem:[%s3 + $0x8] sm:$0xff]
  %v257 = vld [vmem:[%s3 + $0x10] sm:$0xff]
  %v258 = vld [vmem:[%s3 + $0x18] sm:$0xff]
  %v259 = vld [vmem:[%s3 + $0x20] sm:$0xff]
  %v260 = vld [vmem:[%s3 + $0x28] sm:$0xff]
  %v261 = vld [vmem:[%s3 + $0x30] sm:$0xff]
  %v262 = vld [vmem:[%s3 + $0x38] sm:$0xff]
  %v263 = vld [vmem:[%s3 + $0x40] sm:$0xff]
  %v264 = vld [vmem:[%s3 + $0x48] sm:$0xff]
  %v265 = vld [vmem:[%s3 + $0x50] sm:$0xff]
  %v266 = vld [vmem:[%s3 + $0x58] sm:$0xff]
  %v267 = vld [vmem:[%s3 + $0x60] sm:$0xff]
  %v268 = vld [vmem:[%s3 + $0x68] sm:$0xff]
  %v269 = vld [vmem:[%s3 + $0x70] sm:$0xff]
  %v270 = vld [vmem:[%s3 + $0x78] sm:$0xff]
  %v271 = vld [vmem:[%s3 + $0x80] sm:$0xff]
  %v272 = vld [vmem:[%s3 + $0x88] sm:$0xff]
  %v273 = vld [vmem:[%s3 + $0x90] sm:$0xff]
  %v274 = vld [vmem:[%s3 + $0x98] sm:$0xff]
  %v275 = vld [vmem:[%s3 + $0xa0] sm:$0xff]
  %v276 = vld [vmem:[%s3 + $0xa8] sm:$0xff]
  %v277 = vld [vmem:[%s3 + $0xb0] sm:$0xff]
  %v278 = vld [vmem:[%s3 + $0xb8] sm:$0xff]
  %v279 = vld [vmem:[%s3 + $0xc0] sm:$0xff]
  %v280 = vld [vmem:[%s3 + $0xc8] sm:$0xff]
  %v281 = vld [vmem:[%s3 + $0xd0] sm:$0xff]
  %v282 = vld [vmem:[%s3 + $0xd8] sm:$0xff]
  %v283 = vld [vmem:[%s4] sm:$0x1]
  %v285 = vlaneseq
  %v286 = vshrl.u32 %v285, 7
  %v287 = vsub.s32 0, %v286
  %v288 = vrot.slane %v283, %v287
  %vm290 = vcmask 785408
  %v292 = vsel %vm290, %v254, 0
  %294 = vmatprep.subr.mxu0 0.0
  %295 = vmatpush1.msra.mxu0 %v255
  %296 = vmatprep.subr.mxu0 0.0
  %297 = vmatpush1.msra.mxu0 %v256
  %298 = vmatprep.subr.mxu0 0.0
  %299 = vmatpush1.msra.mxu0 %v257
  %300 = vmatprep.subr.mxu0 0.0
  %301 = vmatpush1.msra.mxu0 %v258
  %302 = vmatprep.subr.mxu0 0.0
  %303 = vmatpush1.msra.mxu0 %v259
  %304 = vmatprep.subr.mxu0 0.0
  %305 = vmatpush1.msra.mxu0 %v260
  %306 = vmatprep.subr.mxu0 0.0
  %307 = vmatpush1.msra.mxu0 %v261
  %308 = vmatprep.subr.mxu0 0.0
  %309 = vmatpush1.msra.mxu0 %v262
  %310 = vmatprep.subr.mxu0 0.0
  %311 = vmatpush1.msra.mxu0 %v263
  %312 = vmatprep.subr.mxu0 0.0
  %313 = vmatpush1.msra.mxu0 %v264
  %314 = vmatprep.subr.mxu0 0.0
  %315 = vmatpush1.msra.mxu0 %v265
  %316 = vmatprep.subr.mxu0 0.0
  %317 = vmatpush1.msra.mxu0 %v266
  %318 = vmatprep.subr.mxu0 0.0
  %319 = vmatpush1.msra.mxu0 %v267
  %320 = vmatprep.subr.mxu0 0.0
  %321 = vmatpush1.msra.mxu0 %v268
  %322 = vmatprep.subr.mxu0 0.0
  %323 = vmatpush1.msra.mxu0 %v269
  %324 = vmatprep.subr.mxu0 0.0
  %325 = vmatpush1.msra.mxu0 %v270
  %326 = vmatprep.subr.mxu0 0.0
  %327 = vmatpush1.msra.mxu0 %v271
  %328 = vmatprep.subr.mxu0 0.0
  %329 = vmatpush1.msra.mxu0 %v272
  %330 = vmatprep.subr.mxu0 0.0
  %331 = vmatpush1.msra.mxu0 %v273
  %332 = vmatprep.subr.mxu0 0.0
  %333 = vmatpush1.msra.mxu0 %v274
  %334 = vmatprep.subr.mxu0 0.0
  %335 = vmatpush1.msra.mxu0 %v275
  %336 = vmatprep.subr.mxu0 0.0
  %337 = vmatpush1.msra.mxu0 %v276
  %338 = vmatprep.subr.mxu0 0.0
  %339 = vmatpush1.msra.mxu0 %v277
  %340 = vmatprep.subr.mxu0 0.0
  %341 = vmatpush1.msra.mxu0 %v278
  %342 = vmatprep.subr.mxu0 0.0
  %343 = vmatpush1.msra.mxu0 %v279
  %344 = vmatprep.subr.mxu0 0.0
  %345 = vmatpush1.msra.mxu0 %v280
  %346 = vmatprep.subr.mxu0 0.0
  %347 = vmatpush1.msra.mxu0 %v281
  %348 = vmatprep.subr.mxu0 0.0
  %349 = vmatpush1.msra.mxu0 %v282
  %350 = vmatprep.subr.mxu0 0.0
  %351 = vmatpush1.msra.mxu0 0.0
  %352 = vmatprep.subr.mxu0 0.0
  %353 = vmatpush1.msra.mxu0 0.0
  %354 = vmatprep.subr.mxu0 0.0
  %355 = vmatpush1.msra.mxu0 0.0
  %356 = vmatprep.subr.mxu0 0.0
  %357 = vmatpush1.msra.mxu0 0.0
  %358 = vmatprep.mubr.f32.mxu0 %v292
  %359 = vmatmul.mubr.f32.gmra.mrb[0].mxu0 %v253
  %v360 = vpop.f32.mrb[0].mxu0
  %v361 = vadd.f32 %v288, %v360
  %v362 = vpop.f32.mrb[0].mxu0
  %363 = vdwg.mxu0
  %v364 = vmax.f32 %v361, 0.0
  %v365 = vld [vmem:[%s5] sm:$0xff]
  %v366 = vld [vmem:[%s5 + $0x8] sm:$0xff]
  %v367 = vld [vmem:[%s5 + $0x10] sm:$0xff]
  %v368 = vld [vmem:[%s5 + $0x18] sm:$0xff]
  %v369 = vld [vmem:[%s5 + $0x20] sm:$0xff]
  %v370 = vld [vmem:[%s5 + $0x28] sm:$0xff]
  %v371 = vld [vmem:[%s5 + $0x30] sm:$0xff]
  %vm372 = vcmask 457728
  %v374 = vsel %vm372, %v364, 0
  %376 = vmatprep.subr.mxu0 0.0
  %377 = vmatpush1.msra.mxu0 %v365
  %378 = vmatprep.subr.mxu0 0.0
  %379 = vmatpush1.msra.mxu0 %v366
  %380 = vmatprep.subr.mxu0 0.0
  %381 = vmatpush1.msra.mxu0 %v367
  %382 = vmatprep.subr.mxu0 0.0
  %383 = vmatpush1.msra.mxu0 %v368
  %384 = vmatprep.subr.mxu0 0.0
  %385 = vmatpush1.msra.mxu0 %v369
  %386 = vmatprep.subr.mxu0 0.0
  %387 = vmatpush1.msra.mxu0 %v370
  %388 = vmatprep.subr.mxu0 0.0
  %389 = vmatpush1.msra.mxu0 %v371
  %390 = vmatprep.subr.mxu0 0.0
  %391 = vmatpush1.msra.mxu0 0.0
  %392 = vmatprep.subr.mxu0 0.0
  %393 = vmatpush1.msra.mxu0 0.0
  %394 = vmatprep.subr.mxu0 0.0
  %395 = vmatpush1.msra.mxu0 0.0
  %396 = vmatprep.subr.mxu0 0.0
  %397 = vmatpush1.msra.mxu0 0.0
  %398 = vmatprep.subr.mxu0 0.0
  %399 = vmatpush1.msra.mxu0 0.0
  %400 = vmatprep.subr.mxu0 0.0
  %401 = vmatpush1.msra.mxu0 0.0
  %402 = vmatprep.subr.mxu0 0.0
  %403 = vmatpush1.msra.mxu0 0.0
  %404 = vmatprep.subr.mxu0 0.0
  %405 = vmatpush1.msra.mxu0 0.0
  %406 = vmatprep.subr.mxu0 0.0
  %407 = vmatpush1.msra.mxu0 0.0
  %408 = vmatprep.subr.mxu0 0.0
  %409 = vmatpush1.msra.mxu0 0.0
  %410 = vmatprep.subr.mxu0 0.0
  %411 = vmatpush1.msra.mxu0 0.0
  %412 = vmatprep.subr.mxu0 0.0
  %413 = vmatpush1.msra.mxu0 0.0
  %414 = vmatprep.subr.mxu0 0.0
  %415 = vmatpush1.msra.mxu0 0.0
  %416 = vmatprep.subr.mxu0 0.0
  %417 = vmatpush1.msra.mxu0 0.0
  %418 = vmatprep.subr.mxu0 0.0
  %419 = vmatpush1.msra.mxu0 0.0
  %420 = vmatprep.subr.mxu0 0.0
  %421 = vmatpush1.msra.mxu0 0.0
  %422 = vmatprep.subr.mxu0 0.0
  %423 = vmatpush1.msra.mxu0 0.0
  %424 = vmatprep.subr.mxu0 0.0
  %425 = vmatpush1.msra.mxu0 0.0
  %426 = vmatprep.subr.mxu0 0.0
  %427 = vmatpush1.msra.mxu0 0.0
  %428 = vmatprep.subr.mxu0 0.0
  %429 = vmatpush1.msra.mxu0 0.0
  %430 = vmatprep.subr.mxu0 0.0
  %431 = vmatpush1.msra.mxu0 0.0
  %432 = vmatprep.subr.mxu0 0.0
  %433 = vmatpush1.msra.mxu0 0.0
  %434 = vmatprep.subr.mxu0 0.0
  %435 = vmatpush1.msra.mxu0 0.0
  %436 = vmatprep.subr.mxu0 0.0
  %437 = vmatpush1.msra.mxu0 0.0
  %438 = vmatprep.subr.mxu0 0.0
  %439 = vmatpush1.msra.mxu0 0.0
  %440 = vmatprep.mubr.f32.mxu0 0.0
  %441 = vmatmul.mubr.f32.gmra.mrb[0].mxu0 %v374
  %v442 = vpop.f32.mrb[0].mxu0
  %v443 = vadd.f32 0.0, %v442
  %v444 = vpop.f32.mrb[0].mxu0
  %445 = vdwg.mxu0
  %v446 = vadd.f32 %v165, %v443
  %v447 = vld [vmem:[%s6] sm:$0x1]
  %v449 = vlaneseq
  %v450 = vshrl.u32 %v449, 7
  %v451 = vsub.s32 0, %v450
  %v452 = vrot.slane %v447, %v451
  %v454 = vadd.f32 %v446, %v452
  %v455 = vmax.f32 %v454, 0.0
  %v456 = vld [vmem:[%s7] sm:$0xff]
  %v457 = vld [vmem:[%s7 + $0x8] sm:$0xff]
  %v458 = vld [vmem:[%s7 + $0x10] sm:$0xff]
  %v459 = vld [vmem:[%s7 + $0x18] sm:$0xff]
  %v460 = vld [vmem:[%s7 + $0x20] sm:$0xff]
  %v461 = vld [vmem:[%s7 + $0x28] sm:$0xff]
  %v462 = vld [vmem:[%s7 + $0x30] sm:$0xff]
  %v463 = vld [vmem:[%s7 + $0x38] sm:$0xff]
  %v464 = vld [vmem:[%s7 + $0x40] sm:$0xff]
  %v465 = vld [vmem:[%s7 + $0x48] sm:$0xff]
  %v466 = vld [vmem:[%s7 + $0x50] sm:$0xff]
  %v467 = vld [vmem:[%s7 + $0x58] sm:$0xff]
  %v468 = vld [vmem:[%s7 + $0x60] sm:$0xff]
  %v469 = vld [vmem:[%s7 + $0x68] sm:$0xff]
  %v470 = vld [vmem:[%s7 + $0x70] sm:$0xff]
  %v471 = vld [vmem:[%s7 + $0x78] sm:$0xff]
  %v472 = vld [vmem:[%s8] sm:$0x1]
  %v474 = vlaneseq
  %v475 = vshrl.u32 %v474, 7
  %v476 = vsub.s32 0, %v475
  %v477 = vrot.slane %v472, %v476
  %479 = vmatprep.subr.mxu0 0.0
  %480 = vmatpush1.msra.mxu0 %v456
  %481 = vmatprep.subr.mxu0 0.0
  %482 = vmatpush1.msra.mxu0 %v457
  %483 = vmatprep.subr.mxu0 0.0
  %484 = vmatpush1.msra.mxu0 %v458
  %485 = vmatprep.subr.mxu0 0.0
  %486 = vmatpush1.msra.mxu0 %v459
  %487 = vmatprep.subr.mxu0 0.0
  %488 = vmatpush1.msra.mxu0 %v460
  %489 = vmatprep.subr.mxu0 0.0
  %490 = vmatpush1.msra.mxu0 %v461
  %491 = vmatprep.subr.mxu0 0.0
  %492 = vmatpush1.msra.mxu0 %v462
  %493 = vmatprep.subr.mxu0 0.0
  %494 = vmatpush1.msra.mxu0 %v463
  %495 = vmatprep.subr.mxu0 0.0
  %496 = vmatpush1.msra.mxu0 %v464
  %497 = vmatprep.subr.mxu0 0.0
  %498 = vmatpush1.msra.mxu0 %v465
  %499 = vmatprep.subr.mxu0 0.0
  %500 = vmatpush1.msra.mxu0 %v466
  %501 = vmatprep.subr.mxu0 0.0
  %502 = vmatpush1.msra.mxu0 %v467
  %503 = vmatprep.subr.mxu0 0.0
  %504 = vmatpush1.msra.mxu0 %v468
  %505 = vmatprep.subr.mxu0 0.0
  %506 = vmatpush1.msra.mxu0 %v469
  %507 = vmatprep.subr.mxu0 0.0
  %508 = vmatpush1.msra.mxu0 %v470
  %509 = vmatprep.subr.mxu0 0.0
  %510 = vmatpush1.msra.mxu0 %v471
  %511 = vmatprep.subr.mxu0 0.0
  %512 = vmatpush1.msra.mxu0 0.0
  %513 = vmatprep.subr.mxu0 0.0
  %514 = vmatpush1.msra.mxu0 0.0
  %515 = vmatprep.subr.mxu0 0.0
  %516 = vmatpush1.msra.mxu0 0.0
  %517 = vmatprep.subr.mxu0 0.0
  %518 = vmatpush1.msra.mxu0 0.0
  %519 = vmatprep.subr.mxu0 0.0
  %520 = vmatpush1.msra.mxu0 0.0
  %521 = vmatprep.subr.mxu0 0.0
  %522 = vmatpush1.msra.mxu0 0.0
  %523 = vmatprep.subr.mxu0 0.0
  %524 = vmatpush1.msra.mxu0 0.0
  %525 = vmatprep.subr.mxu0 0.0
  %526 = vmatpush1.msra.mxu0 0.0
  %527 = vmatprep.subr.mxu0 0.0
  %528 = vmatpush1.msra.mxu0 0.0
  %529 = vmatprep.subr.mxu0 0.0
  %530 = vmatpush1.msra.mxu0 0.0
  %531 = vmatprep.subr.mxu0 0.0
  %532 = vmatpush1.msra.mxu0 0.0
  %533 = vmatprep.subr.mxu0 0.0
  %534 = vmatpush1.msra.mxu0 0.0
  %535 = vmatprep.subr.mxu0 0.0
  %536 = vmatpush1.msra.mxu0 0.0
  %537 = vmatprep.subr.mxu0 0.0
  %538 = vmatpush1.msra.mxu0 0.0
  %539 = vmatprep.subr.mxu0 0.0
  %540 = vmatpush1.msra.mxu0 0.0
  %541 = vmatprep.subr.mxu0 0.0
  %542 = vmatpush1.msra.mxu0 0.0
  %543 = vmatprep.mubr.f32.mxu0 0.0
  %544 = vmatmul.mubr.f32.gmra.mrb[0].mxu0 %v455
  %v545 = vpop.f32.mrb[0].mxu0
  %v546 = vadd.f32 %v477, %v545
  %v547 = vpop.f32.mrb[0].mxu0
  %548 = vdwg.mxu0
  %v549 = vmax.f32 %v546, 0.0
  %v550 = vld [vmem:[%s9] sm:$0xff]
  %v551 = vld [vmem:[%s9 + $0x8] sm:$0xff]
  %v552 = vld [vmem:[%s9 + $0x10] sm:$0xff]
  %v553 = vld [vmem:[%s9 + $0x18] sm:$0xff]
  %v554 = vld [vmem:[%s9 + $0x20] sm:$0xff]
  %v555 = vld [vmem:[%s9 + $0x28] sm:$0xff]
  %v556 = vld [vmem:[%s9 + $0x30] sm:$0xff]
  %v557 = vld [vmem:[%s9 + $0x38] sm:$0xff]
  %v558 = vld [vmem:[%s10] sm:$0x1]
  %v560 = vlaneseq
  %v561 = vshrl.u32 %v560, 7
  %v562 = vsub.s32 0, %v561
  %v563 = vrot.slane %v558, %v562
  %vm565 = vcmask 523264
  %v567 = vsel %vm565, %v549, 0
  %569 = vmatprep.subr.mxu0 0.0
  %570 = vmatpush1.msra.mxu0 %v550
  %571 = vmatprep.subr.mxu0 0.0
  %572 = vmatpush1.msra.mxu0 %v551
  %573 = vmatprep.subr.mxu0 0.0
  %574 = vmatpush1.msra.mxu0 %v552
  %575 = vmatprep.subr.mxu0 0.0
  %576 = vmatpush1.msra.mxu0 %v553
  %577 = vmatprep.subr.mxu0 0.0
  %578 = vmatpush1.msra.mxu0 %v554
  %579 = vmatprep.subr.mxu0 0.0
  %580 = vmatpush1.msra.mxu0 %v555
  %581 = vmatprep.subr.mxu0 0.0
  %582 = vmatpush1.msra.mxu0 %v556
  %583 = vmatprep.subr.mxu0 0.0
  %584 = vmatpush1.msra.mxu0 %v557
  %585 = vmatprep.subr.mxu0 0.0
  %586 = vmatpush1.msra.mxu0 0.0
  %587 = vmatprep.subr.mxu0 0.0
  %588 = vmatpush1.msra.mxu0 0.0
  %589 = vmatprep.subr.mxu0 0.0
  %590 = vmatpush1.msra.mxu0 0.0
  %591 = vmatprep.subr.mxu0 0.0
  %592 = vmatpush1.msra.mxu0 0.0
  %593 = vmatprep.subr.mxu0 0.0
  %594 = vmatpush1.msra.mxu0 0.0
  %595 = vmatprep.subr.mxu0 0.0
  %596 = vmatpush1.msra.mxu0 0.0
  %597 = vmatprep.subr.mxu0 0.0
  %598 = vmatpush1.msra.mxu0 0.0
  %599 = vmatprep.subr.mxu0 0.0
  %600 = vmatpush1.msra.mxu0 0.0
  %601 = vmatprep.subr.mxu0 0.0
  %602 = vmatpush1.msra.mxu0 0.0
  %603 = vmatprep.subr.mxu0 0.0
  %604 = vmatpush1.msra.mxu0 0.0
  %605 = vmatprep.subr.mxu0 0.0
  %606 = vmatpush1.msra.mxu0 0.0
  %607 = vmatprep.subr.mxu0 0.0
  %608 = vmatpush1.msra.mxu0 0.0
  %609 = vmatprep.subr.mxu0 0.0
  %610 = vmatpush1.msra.mxu0 0.0
  %611 = vmatprep.subr.mxu0 0.0
  %612 = vmatpush1.msra.mxu0 0.0
  %613 = vmatprep.subr.mxu0 0.0
  %614 = vmatpush1.msra.mxu0 0.0
  %615 = vmatprep.subr.mxu0 0.0
  %616 = vmatpush1.msra.mxu0 0.0
  %617 = vmatprep.subr.mxu0 0.0
  %618 = vmatpush1.msra.mxu0 0.0
  %619 = vmatprep.subr.mxu0 0.0
  %620 = vmatpush1.msra.mxu0 0.0
  %621 = vmatprep.subr.mxu0 0.0
  %622 = vmatpush1.msra.mxu0 0.0
  %623 = vmatprep.subr.mxu0 0.0
  %624 = vmatpush1.msra.mxu0 0.0
  %625 = vmatprep.subr.mxu0 0.0
  %626 = vmatpush1.msra.mxu0 0.0
  %627 = vmatprep.subr.mxu0 0.0
  %628 = vmatpush1.msra.mxu0 0.0
  %629 = vmatprep.subr.mxu0 0.0
  %630 = vmatpush1.msra.mxu0 0.0
  %631 = vmatprep.subr.mxu0 0.0
  %632 = vmatpush1.msra.mxu0 0.0
  %633 = vmatprep.mubr.f32.mxu0 0.0
  %634 = vmatmul.mubr.f32.gmra.mrb[0].mxu0 %v567
  %v635 = vpop.f32.mrb[0].mxu0
  %v636 = vadd.f32 %v563, %v635
  %v637 = vpop.f32.mrb[0].mxu0
  %638 = vdwg.mxu0
  %vm639 = vcmask 31744
  %640 = vst.msk [vmem:[%s11] sm:$0xff] %vm639, %v636
  // Predicated region
  $region46: #{sale_predictor.1} parent=0 // pred_check
    _
  $region47: #{sale_predictor.1} parent=0 // pred_check_branch
    %642 = sbr.rel (0) target = $region49
  $region48: #{sale_predictor.1} parent=0 // pred_region
    _
  $region49: #{sale_predictor.1} parent=0 // pred_fallthru
    _
  // Predicated region
  $region50: #{sale_predictor.1} parent=0 // pred_check
    _
  $region51: #{sale_predictor.1} parent=0 // pred_check_branch
    %644 = sbr.rel (0) target = $region53
  $region52: #{sale_predictor.1} parent=0 // pred_region
    _
  $region53: #{sale_predictor.1} parent=0 // pred_fallthru
    _

</llo_original>
